<compile_context>
chip_gen: v5e
topology: v5e:2x2
jax: 0.10.0
libtpu: 0.0.40
codegen_flags: <defaults>
</compile_context>

<pallas_src>
import math

import jax
import jax.numpy as jnp
from jax.experimental import pallas as pl
from jax.experimental.pallas import tpu as pltpu


def _round_up(x, m):
    return (x + m - 1) // m * m


# ----------------------------------------------------------------------------- kernels
def _mm_kernel(x_ref, w_ref, o_ref):
    """Full-K contraction in one shot: no K grid axis, no accumulator scratch."""
    o_ref[...] = jnp.dot(x_ref[...], w_ref[...],
                         preferred_element_type=jnp.float32).astype(o_ref.dtype)


def _mm_acc_kernel(x_ref, w_ref, o_ref, acc_ref):
    """Tiled (tm,tk)@(tk,tn) with an f32 VMEM accumulator over the K grid axis."""
    @pl.when(pl.program_id(2) == 0)
    def _():
        acc_ref[...] = jnp.zeros_like(acc_ref)

    acc_ref[...] += jnp.dot(x_ref[...], w_ref[...],
                            preferred_element_type=jnp.float32)

    @pl.when(pl.program_id(2) == pl.num_programs(2) - 1)
    def _():
        o_ref[...] = acc_ref[...].astype(o_ref.dtype)


# ----------------------------------------------------------------------------- matmul wrapper
# Conservative per-step VMEM budget that fits the default scoped limit on
# v5e (16 MiB) headroom-tight, and comfortably on v6e/v7x (32 MiB scoped).
_VMEM_BUDGET = 14 * 1024 * 1024


def _fused_matmul(x, w_p):
    """y = x @ w_p  with x:(M, K), w_p:(K, Np) already lane-dense (Np % 128 == 0).

    Returns the padded (Mp, Np) f32 result; the caller slices the valid region.
    Zero-padding is exact for a matmul.
    """
    M, K = x.shape
    Kw, Np = w_p.shape
    assert K == Kw, "input feature dim mismatch"
    x = x.astype(w_p.dtype)                       # bf16 cast (if any) before padding
    in_bytes = jnp.dtype(w_p.dtype).itemsize

    # ---- choose the M tile: big tiles, but >=2 parallel tiles for v7x megacore
    Mp = _round_up(M, 8)
    if Mp <= 512:
        tm = _round_up((Mp + 1) // 2, 8) if Mp >= 16 else Mp   # 2 M-tiles when possible
    else:
        tm = 512
    Mp = _round_up(Mp, tm)
    if Mp > M:
        x = jnp.pad(x, ((0, Mp - M), (0, 0)))
    grid_m = Mp // tm

    # ---------------- path A: whole weight resident in VMEM, 1-D grid over M ---
    # x and W are each streamed from HBM exactly once; no K padding at all
    # (block dim == full array dim is legal), no accumulator, no K grid axis.
    vmem_need = 2 * tm * K * in_bytes + 2 * K * Np * in_bytes + 2 * tm * Np * 4
    if vmem_need <= _VMEM_BUDGET:
        cost = pl.CostEstimate(
            flops=2 * Mp * Np * K, transcendentals=0,
            bytes_accessed=(Mp * K + K * Np) * in_bytes + Mp * Np * 4)
        return pl.pallas_call(
            _mm_kernel,
            out_shape=jax.ShapeDtypeStruct((Mp, Np), jnp.float32),
            grid_spec=pltpu.PrefetchScalarGridSpec(
                num_scalar_prefetch=0,
                grid=(grid_m,),
                in_specs=[pl.BlockSpec((tm, K), lambda i: (i, 0)),
                          pl.BlockSpec((K, Np), lambda i: (0, 0))],
                out_specs=pl.BlockSpec((tm, Np), lambda i: (i, 0)),
            ),
            compiler_params=pltpu.CompilerParams(
                dimension_semantics=("parallel",)),
            cost_estimate=cost,
        )(x, w_p)

    # ---------------- path B: tiled grid (only for very large fused weights) ---
    tn = 256 if Np % 256 == 0 else 128
    Kp = _round_up(K, 128)
    tk = min(512, Kp)
    while Kp % tk:                                # Kp is a multiple of 128 -> terminates
        tk -= 128
    if Kp > K:
        x = jnp.pad(x, ((0, 0), (0, Kp - K)))
        w_p = jnp.pad(w_p, ((0, Kp - K), (0, 0)))
    grid_n = Np // tn
    grid_k = Kp // tk
    cost = pl.CostEstimate(
        flops=2 * Mp * Np * Kp, transcendentals=0,
        bytes_accessed=(Mp * Kp * grid_n + Kp * Np * grid_m) * in_bytes + Mp * Np * 4)

    if grid_k == 1:
        # No K reduction -> write o_ref directly, skip the acc scratch entirely.
        return pl.pallas_call(
            _mm_kernel,
            out_shape=jax.ShapeDtypeStruct((Mp, Np), jnp.float32),
            grid_spec=pltpu.PrefetchScalarGridSpec(
                num_scalar_prefetch=0,
                grid=(grid_m, grid_n),
                in_specs=[pl.BlockSpec((tm, Kp), lambda i, j: (i, 0)),
                          pl.BlockSpec((Kp, tn), lambda i, j: (0, j))],
                out_specs=pl.BlockSpec((tm, tn), lambda i, j: (i, j)),
            ),
            compiler_params=pltpu.CompilerParams(
                dimension_semantics=("parallel", "parallel")),
            cost_estimate=cost,
        )(x, w_p)

    return pl.pallas_call(
        _mm_acc_kernel,
        out_shape=jax.ShapeDtypeStruct((Mp, Np), jnp.float32),
        grid_spec=pltpu.PrefetchScalarGridSpec(
            num_scalar_prefetch=0,
            grid=(grid_m, grid_n, grid_k),
            in_specs=[pl.BlockSpec((tm, tk), lambda i, j, k: (i, k)),
                      pl.BlockSpec((tk, tn), lambda i, j, k: (k, j))],
            out_specs=pl.BlockSpec((tm, tn), lambda i, j, k: (i, j)),
            scratch_shapes=[pltpu.VMEM((tm, tn), jnp.float32)],
        ),
        compiler_params=pltpu.CompilerParams(
            dimension_semantics=("parallel", "parallel", "arbitrary")),
        cost_estimate=cost,
    )(x, w_p)


# ----------------------------------------------------------------------------- module
class MultiPrototypes:
    """Pallas-TPU equivalent of SwAV's MultiPrototypes.

    N bias-free linear heads over the same input, fused into one lane-dense MXU
    matmul.  The fused / transposed / (optionally bf16) / padded weight matrix
    is built ONCE at construction, not on every forward.
    """

    def __init__(self, output_dim, nmb_prototypes, key, *, use_bf16=False):
        self.output_dim = output_dim
        self.nmb_prototypes = list(nmb_prototypes)
        self.nmb_heads = len(self.nmb_prototypes)
        self.use_bf16 = use_bf16

        # nn.Linear(output_dim, k, bias=False) default init: U(-1/sqrt(in), 1/sqrt(in))
        bound = 1.0 / math.sqrt(output_dim)
        ws = []
        for k_heads in self.nmb_prototypes:
            key, sub = jax.random.split(key)
            ws.append(jax.random.uniform(sub, (k_heads, output_dim),
                                         jnp.float32, -bound, bound))
        self.weights = ws                                   # PyTorch layout (k_i, D)

        # Hoisted fusion (done once): concat heads -> (K, N), cast BEFORE padding,
        # pad N to a lane-dense multiple of 128.
        self.n_total = sum(self.nmb_prototypes)
        compute_dtype = jnp.bfloat16 if use_bf16 else jnp.float32
        w_all = jnp.concatenate(ws, axis=0).T.astype(compute_dtype)   # (K, N)
        np_pad = _round_up(self.n_total, 128)
        self.w_fused = jnp.pad(w_all, ((0, 0), (0, np_pad - self.n_total)))

    def __call__(self, x):
        """x: (batch, output_dim) -> list of (batch, k_i), matching the PyTorch module."""
        M = x.shape[0]
        y = _fused_matmul(x, self.w_fused)[:M, :self.n_total]
        # NOTE: `y` (the fused (M, sum_k) slab) is lane-dense; consumers that can
        # accept it plus head offsets avoid the narrow per-head slices below.
        outs, off = [], 0
        for s in self.nmb_prototypes:
            outs.append(y[:, off:off + s])
            off += s
        return outs


# ----------------------------------------------------------------------------- main
if __name__ == "__main__":
    key = jax.random.PRNGKey(0)
    wkey, xkey = jax.random.split(key)

    output_dim = 32
    nmb_prototypes = [8, 16, 24]   # three prototype heads, like SwAV multi-head mode
    batch = 4

    x = jax.random.normal(xkey, (batch, output_dim), jnp.float32)

    # f32 path: exact check against the pure-JAX reference of the PyTorch module.
    model = MultiPrototypes(output_dim, nmb_prototypes, wkey)
    outs = model(x)
    for o in outs:
        jax.block_until_ready(o)
    assert [tuple(o.shape) for o in outs] == [(batch, k) for k in nmb_prototypes]
    for o, w in zip(outs, model.weights):
        ref = x @ w.T
        assert jnp.allclose(o, ref, atol=1e-5, rtol=1e-5)

    # bf16 path (MXU-native on v5e/v6e/v7x, f32 result): looser tolerance.
    model_bf16 = MultiPrototypes(output_dim, nmb_prototypes, wkey, use_bf16=True)
    outs_bf16 = model_bf16(x)
    for o in outs_bf16:
        jax.block_until_ready(o)
    for o, w in zip(outs_bf16, model_bf16.weights):
        ref = x @ w.T
        assert jnp.allclose(o, ref, atol=2e-2, rtol=2e-2)

    print("KERNEL_OK")
</pallas_src>

<mosaic_0001>
module attributes {stable_mosaic.version = 11 : i64} {
  func.func @_mm_kernel(%arg0: i32, %arg1: memref<8x32xf32, #tpu.memory_space<vmem>>, %arg2: memref<32x128xf32, #tpu.memory_space<vmem>>, %arg3: memref<8x128xf32, #tpu.memory_space<vmem>>) attributes {dimension_semantics = [#tpu.dimension_semantics<parallel>], iteration_bounds = array<i64: 1>, scalar_prefetch = 0 : i64, scratch_operands = 0 : i64, tpu.core_type = #tpu.core_type<tc>, window_params = [{transform_indices = @transform_0, window_bounds = array<i64: 8, 32>}, {pipeline_mode = #tpu.pipeline_mode<synchronous>, transform_indices = @transform_1, window_bounds = array<i64: 32, 128>}, {transform_indices = @transform_2, window_bounds = array<i64: 8, 128>}]} {
    %c0 = arith.constant 0 : index
    %c0_0 = arith.constant 0 : index
    %0 = vector.load %arg1[%c0, %c0_0] : memref<8x32xf32, #tpu.memory_space<vmem>>, vector<8x32xf32>
    %c0_1 = arith.constant 0 : index
    %c0_2 = arith.constant 0 : index
    %1 = vector.load %arg2[%c0_1, %c0_2] : memref<32x128xf32, #tpu.memory_space<vmem>>, vector<32x128xf32>
    %cst = arith.constant dense<0.000000e+00> : vector<8x128xf32>
    %2 = tpu.matmul %0, %1, %cst {dimension_numbers = #tpu.dot_dimension_numbers<[1], [0], [0], [1], [0, 0, 1, 1], [], []>} : vector<8x32xf32>, vector<32x128xf32>, vector<8x128xf32> -> vector<8x128xf32>
    %c0_3 = arith.constant 0 : index
    %c0_4 = arith.constant 0 : index
    %3 = vector.load %arg3[%c0_3, %c0_4] : memref<8x128xf32, #tpu.memory_space<vmem>>, vector<8x128xf32>
    tpu.vector_store %arg3[%c0_3, %c0_4], %2 {strides = array<i32>} : memref<8x128xf32, #tpu.memory_space<vmem>>, vector<8x128xf32>,
    return
  }
  func.func @transform_0(%arg0: i32) -> (i32, i32) {
    %c0_i32 = arith.constant 0 : i32
    %c0_i32_0 = arith.constant 0 : i32
    return %arg0, %c0_i32 : i32, i32
  }
  func.func @transform_1(%arg0: i32) -> (i32, i32) {
    %c0_i32 = arith.constant 0 : i32
    %c0_i32_0 = arith.constant 0 : i32
    %c0_i32_1 = arith.constant 0 : i32
    return %c0_i32, %c0_i32_0 : i32, i32
  }
  func.func @transform_2(%arg0: i32) -> (i32, i32) {
    %c0_i32 = arith.constant 0 : i32
    %c0_i32_0 = arith.constant 0 : i32
    return %arg0, %c0_i32 : i32, i32
  }
}

</mosaic_0001>

<llo_original>
// kernel: tpu_custom_call.1
$region0: #{tpu_custom_call.1}
  #allocation0 [shape = 'u32[]', space=smem, size = 0x4, offset = 0x4, fixed_abs, tag = 'smem constant byte address 0x4 - core index']
  #allocation1 [shape = 'u32[72,128]{1,0:T(1,128)}', space=vmem, size = 0x9000, scoped, tag = 'internal scratch']
  %s0 = inlined_call_operand.hbm [shape: f32[8,32], index: 0, kind: input, shape index: {}]
  %s1 = inlined_call_operand.hbm [shape: f32[32,128], index: 1, kind: input, shape index: {}]
  %s2 = inlined_call_operand.hbm [shape: f32[8,128], index: 2, kind: output, shape index: {}]
  %s3 = sld [smem:[#allocation0]]
  $region26: #{tpu_custom_call.1} parent=0
    _
  %s5 = ssub.s32 1, %s3
  %s6 = scalar_select 0, %s5, %s3
  $region1: #{tpu_custom_call.1} parent=0
    #allocation2 [shape = 'u8[4096]{0}', space=vmem, size = 0x1000, scoped, tag = 'input window, operand 0, single buffered']
    #allocation3 [shape = 's32[1]{0}', space=sflag, size = 0x4, scoped, tag = 'scoped memory for tpu_custom_call.1']
    #allocation4 [shape = 's32[1]{0}', space=sflag, size = 0x4, scoped, tag = 'scoped memory for tpu_custom_call.1']
    #allocation5 [shape = 'u8[16384]{0}', space=vmem, size = 0x4000, scoped, tag = 'input window, operand 1, single buffered']
    #allocation6 [shape = 's32[1]{0}', space=sflag, size = 0x4, scoped, tag = 'scoped memory for tpu_custom_call.1']
    #allocation7 [shape = 'u8[4096]{0}', space=vmem, size = 0x1000, scoped, tag = 'output window, operand 0, single buffered']
    %7 = vsyncpa [#allocation3], 0
    %8 = vsyncpa [#allocation6], 0
    %9 = vsyncpa [#allocation4], 0
    // Predicated region
    $region2: #{tpu_custom_call.1} parent=1 // pred_check
      _
    $region3: #{tpu_custom_call.1} parent=1 // pred_check_branch
      %11 = sbr.rel (0) target = $region5
    $region4: #{tpu_custom_call.1} parent=1 // pred_region
      %13 = vsyncadd [#allocation3], 0
      %s15 = sshll.u32 %s0, 4
      %s16 = int_to_ptr.hbm [resolvable:$true] %s15
      %s17 = sshll.u32 [#allocation2], 4
      %s18 = int_to_ptr.vmem [resolvable:$true] %s17
      %20 = dma.hbm_to_vmem [thread:$0]  %s16, 128, %s18, [#allocation3]
    $region5: #{tpu_custom_call.1} parent=1 // pred_fallthru
      _
    // Predicated region
    $region6: #{tpu_custom_call.1} parent=1 // pred_check
      _
    $region7: #{tpu_custom_call.1} parent=1 // pred_check_branch
      %22 = sbr.rel (0) target = $region9
    $region8: #{tpu_custom_call.1} parent=1 // pred_region
      %24 = vsyncadd [#allocation6], 0
      %s25 = sshll.u32 %s1, 4
      %s26 = int_to_ptr.hbm [resolvable:$true] %s25
      %s27 = sshll.u32 [#allocation5], 4
      %s28 = int_to_ptr.vmem [resolvable:$true] %s27
      %33 = dma.hbm_to_vmem [thread:$0]  %s26, 512, %s28, [#allocation6], 128, 128, 8
    $region9: #{tpu_custom_call.1} parent=1 // pred_fallthru
      _
    // Predicated region
    $region10: #{tpu_custom_call.1} parent=1 // pred_check
      _
    $region11: #{tpu_custom_call.1} parent=1 // pred_check_branch
      %35 = sbr.rel (0) target = $region13
    $region12: #{tpu_custom_call.1} parent=1 // pred_region
      %37 = dma.done [#allocation3], 128
    $region13: #{tpu_custom_call.1} parent=1 // pred_fallthru
      _
    // Predicated region
    $region14: #{tpu_custom_call.1} parent=1 // pred_check
      _
    $region15: #{tpu_custom_call.1} parent=1 // pred_check_branch
      %39 = sbr.rel (0) target = $region17
    $region16: #{tpu_custom_call.1} parent=1 // pred_region
      %41 = dma.done [#allocation6], 512
    $region17: #{tpu_custom_call.1} parent=1 // pred_fallthru
      _
    %v42 = vld [vmem:[#allocation2] sm:$0xff]
    %v43 = vld [vmem:[#allocation5] sm:$0xff]
    %v44 = vld [vmem:[#allocation5 + $0x8] sm:$0xff]
    %v45 = vld [vmem:[#allocation5 + $0x10] sm:$0xff]
    %v46 = vld [vmem:[#allocation5 + $0x18] sm:$0xff]
    %vm47 = vcmask 261120
    %v49 = vsel %vm47, %v42, 0
    %51 = vmatpush.msra.mxu0 0.0
    %52 = vmatpush.msra.mxu0 0.0
    %53 = vmatpush.msra.mxu0 0.0
    %54 = vmatpush.msra.mxu0 0.0
    %55 = vmatpush.msra.mxu0 0.0
    %56 = vmatpush.msra.mxu0 0.0
    %57 = vmatpush.msra.mxu0 0.0
    %58 = vmatpush.msra.mxu0 0.0
    %59 = vmatpush.msra.mxu0 0.0
    %60 = vmatpush.msra.mxu0 0.0
    %61 = vmatpush.msra.mxu0 0.0
    %62 = vmatpush.msra.mxu0 0.0
    %63 = vmatpush.msra.mxu0 %v46
    %64 = vmatpush.msra.mxu0 %v45
    %65 = vmatpush.msra.mxu0 %v44
    %66 = vmatpush.msra.mxu0 %v43
    %67 = vmatmul.f32.gmra.mxu0 %v49
    %v68 = vpop.f32.mrf.mxu0
    %v69 = vadd.f32 0.0, %v68
    %70 = vdwg.mxu0
    %71 = vst [vmem:[#allocation7] sm:$0xff] %v69
    // Predicated region
    $region18: #{tpu_custom_call.1} parent=1 // pred_check
      _
    $region19: #{tpu_custom_call.1} parent=1 // pred_check_branch
      %73 = sbr.rel (0) target = $region21
    $region20: #{tpu_custom_call.1} parent=1 // pred_region
      %75 = vsyncadd [#allocation4], 0
      %s77 = sshll.u32 [#allocation7], 4
      %s78 = int_to_ptr.vmem [resolvable:$true] %s77
      %s79 = sshll.u32 %s2, 4
      %s80 = int_to_ptr.hbm [resolvable:$true] %s79
      %82 = dma.vmem_to_hbm [thread:$0]  %s78, 128, %s80, [#allocation4]
    $region21: #{tpu_custom_call.1} parent=1 // pred_fallthru
      _
    // Predicated region
    $region22: #{tpu_custom_call.1} parent=1 // pred_check
      _
    $region23: #{tpu_custom_call.1} parent=1 // pred_check_branch
      %84 = sbr.rel (0) target = $region25
    $region24: #{tpu_custom_call.1} parent=1 // pred_region
      %86 = dma.done [#allocation4], 128
    $region25: #{tpu_custom_call.1} parent=1 // pred_fallthru
      _
    %87 = vsyncpa [#allocation3], 1
    %88 = vsyncpa [#allocation6], 1
    %89 = vsyncpa [#allocation4], 1

</llo_original>
